<compile_context>
chip_gen: v5e
topology: v5e:2x2
jax: 0.10.0
libtpu: 0.0.40
codegen_flags: <defaults>
</compile_context>

<pallas_src>
import jax
import jax.numpy as jnp
from jax.experimental import pallas as pl
from jax.experimental.pallas import tpu as pltpu


# ----------------------------------------------------------------------------
# Pallas kernel: one modality's ecosystem encoder  y = x @ W^T + b
# ----------------------------------------------------------------------------
def _encoder_kernel(x_ref, wt_ref, b_ref, out_ref):
    # Blocks: x (tb, H) in the caller's dtype (f32 ok), wt (1, H, tn) bf16,
    # b (1, 1, tn) f32, out (tb, tn).  The activation cast to the MXU compute
    # dtype happens HERE, in VMEM, so no extra HBM copy is ever materialized.
    x = x_ref[...].astype(wt_ref.dtype)
    acc = jnp.dot(x, wt_ref[0], preferred_element_type=jnp.float32)
    out_ref[...] = (acc + b_ref[0]).astype(out_ref.dtype)


def _pick_tiles(B, H, Hout, x_bytes, w_bytes, out_bytes,
                tb_max=512, tn_max=512, budget=26 << 20):
    """Pick (tb, tn) as large as possible (<= 512) under a VMEM budget.

    Footprint model: double-buffered x, weight, bias and output blocks with the
    full K (=H) dimension resident.  Shrinking keeps tb a multiple of 8 and tn
    a multiple of 128 (or full extent) so the (8,128) BlockSpec rule holds.
    """
    def footprint(tb, tn):
        return 2 * (tb * H * x_bytes + H * tn * w_bytes + tn * 4
                    + tb * tn * out_bytes)

    tb = B if B <= tb_max else tb_max
    tn = Hout if Hout <= tn_max else tn_max
    while footprint(tb, tn) > budget and (tb > 256 or tn > 256):
        if tb > 256 and (tb >= tn or tn <= 256):
            tb = -(-(tb // 2) // 8) * 8          # halve, keep multiple of 8
        else:
            tn = -(-(tn // 2) // 128) * 128      # halve, keep multiple of 128
    # TODO(synk): for very large H add a K grid axis ('arbitrary') with an f32
    # accumulator scratch instead of keeping the full K dimension resident.
    return tb, tn, footprint(tb, tn)


def ecosystem_encode(x, enc_wt_c, enc_b, mod_idx, *, out_dtype=jnp.float32,
                     tb_max=512, tn_max=512):
    """Linear(H, Hout) of modality `mod_idx` applied to features x (B, H).

    x        : (B, H)        any float dtype (cast to the weight dtype in VMEM)
    enc_wt_c : (M, H, Hout)  compute dtype (bf16), pre-transposed (in, out)
    enc_b    : (M, 1, Hout)  f32
    mod_idx  : static Python int — selects the encoder's weights; the slice is
               taken by the BlockSpec index_map directly from HBM (no copy).
    """
    B, H = x.shape
    M, Hw, Hout = enc_wt_c.shape
    assert Hw == H, "encoder weight inner dim must match feature dim"
    tb, tn, fp = _pick_tiles(B, H, Hout,
                             jnp.dtype(x.dtype).itemsize,
                             jnp.dtype(enc_wt_c.dtype).itemsize,
                             jnp.dtype(out_dtype).itemsize,
                             tb_max=tb_max, tn_max=tn_max)
    # Batch axis innermost: the weight/bias index_maps do not depend on it, so
    # the (H, tn) weight tile stays resident in VMEM across the batch sweep.
    grid = (pl.cdiv(Hout, tn), pl.cdiv(B, tb))
    vmem_limit = int(min(max(2 * fp, 32 << 20), 48 << 20))
    m = int(mod_idx)  # bind statically for the index_map closures below
    return pl.pallas_call(
        _encoder_kernel,
        out_shape=jax.ShapeDtypeStruct((B, Hout), out_dtype),
        grid=grid,
        in_specs=[
            pl.BlockSpec((tb, H), lambda n, b: (b, 0)),
            pl.BlockSpec((1, H, tn), lambda n, b, m=m: (m, 0, n)),
            pl.BlockSpec((1, 1, tn), lambda n, b, m=m: (m, 0, n)),
        ],
        out_specs=pl.BlockSpec((tb, tn), lambda n, b: (b, n)),
        compiler_params=pltpu.CompilerParams(
            dimension_semantics=("parallel", "parallel"),
            vmem_limit_bytes=vmem_limit),
    )(x, enc_wt_c, enc_b)


# ----------------------------------------------------------------------------
# DMIMLayer (JAX / Pallas)
# ----------------------------------------------------------------------------
class DMIMLayerPallas:
    def __init__(self, num_modalities, hidden_dim, key,
                 compute_dtype=jnp.bfloat16, out_dtype=jnp.float32):
        self.num_modalities = num_modalities
        self.hidden_dim = hidden_dim
        self.compute_dtype = compute_dtype
        self.out_dtype = out_dtype
        M, H = num_modalities, hidden_dim

        # nn.Parameter(torch.ones(M, M))
        self.modality_importance = jnp.ones((M, M), jnp.float32)

        k1, k2, k3, k4 = jax.random.split(key, 4)
        bound = 1.0 / (H ** 0.5)
        # context_modulator: Linear(H, M*M) + Sigmoid.  M*M is tiny, so it runs
        # in plain XLA (a Pallas launch would be overhead-dominated with a
        # <128-lane masked store).  Weight pre-transposed once at init.
        ctx_w = jax.random.uniform(k1, (M * M, H), jnp.float32, -bound, bound)
        self.ctx_wt = jnp.asarray(ctx_w.T)                        # (H, M*M)
        self.ctx_b = jax.random.uniform(k2, (M * M,), jnp.float32,
                                        -bound, bound)            # (M*M,)
        # ecosystem_encoders: M x Linear(H, H).  Stored ONLY in the compute
        # dtype (no f32 master copy), pre-transposed to (in, out).
        enc_w = jax.random.uniform(k3, (M, H, H), jnp.float32, -bound, bound)
        self.enc_wt_c = jnp.transpose(enc_w, (0, 2, 1)).astype(compute_dtype)
        self.enc_b = jax.random.uniform(k4, (M, H), jnp.float32,
                                        -bound, bound).reshape(M, 1, H)
        # TODO(synk): optional int8 (v5e/v6e) / fp8-e4m3 (v7x) weight-streaming
        # path with per-output-channel scales folded into the bias add.

    def __call__(self, modality_features, task_context=None):
        M, H = self.num_modalities, self.hidden_dim

        # Availability is known at trace time (Python None handling), so the
        # mask is effectively a compile-time constant.
        avail = [f is not None for f in modality_features]
        mask = jnp.asarray([1.0 if a else 0.0 for a in avail], jnp.float32)
        base_importance = self.modality_importance * mask[:, None]

        if task_context is not None:
            # Plain XLA: matvec + sigmoid + elementwise products fuse for free.
            logits = (task_context.reshape(-1).astype(jnp.float32) @ self.ctx_wt
                      + self.ctx_b)
            context_weights = jax.nn.sigmoid(logits).reshape(M, M)
            importance = base_importance * context_weights
        else:
            importance = base_importance

        enhanced_features = []
        for i, f in enumerate(modality_features):
            if f is None:
                enhanced_features.append(None)
                continue
            mod_importance = importance[i]
            if M != f.shape[1]:
                # Mirrors the torch fallback (importance-dim != feature-dim
                # -> ones(feat_dim)); intentional, no runtime print.
                mod_importance = jnp.ones((f.shape[1],), jnp.float32)
            encoded = ecosystem_encode(f, self.enc_wt_c, self.enc_b, i,
                                       out_dtype=self.out_dtype)
            enhanced_features.append((encoded, mod_importance))
        return enhanced_features, importance


# ----------------------------------------------------------------------------
# Demo / smoke test
# ----------------------------------------------------------------------------
if __name__ == "__main__":
    M, H, B = 4, 32, 2
    key = jax.random.PRNGKey(0)
    k_params, k_f0, k_f1, k_f3, k_ctx = jax.random.split(key, 5)

    layer = DMIMLayerPallas(num_modalities=M, hidden_dim=H, key=k_params)

    modality_features = [
        jax.random.normal(k_f0, (B, H), jnp.float32),
        jax.random.normal(k_f1, (B, H), jnp.float32),
        None,  # missing modality -> no kernel launch, no weight DMA for it
        jax.random.normal(k_f3, (B, H), jnp.float32),
    ]
    task_context = jax.random.normal(k_ctx, (H,), jnp.float32)

    enhanced_features, importance = layer(modality_features, task_context)

    jax.block_until_ready(importance)
    for item in enhanced_features:
        if item is not None:
            jax.block_until_ready(item[0])
            jax.block_until_ready(item[1])

    # ---- sanity checks against a pure-JAX reference ------------------------
    mask = jnp.asarray([1.0, 1.0, 0.0, 1.0], jnp.float32)
    cw_ref = jax.nn.sigmoid(task_context @ layer.ctx_wt
                            + layer.ctx_b).reshape(M, M)
    imp_ref = layer.modality_importance * mask[:, None] * cw_ref
    assert jnp.allclose(importance, imp_ref, atol=1e-5), "importance mismatch"

    # Encoder reference uses the same bf16-rounded operands as the kernel
    # (documented contract: bf16 compute dtype, f32 accumulation/output).
    x0_bf = modality_features[0].astype(jnp.bfloat16).astype(jnp.float32)
    w0_bf = layer.enc_wt_c[0].astype(jnp.float32)
    enc0_ref = x0_bf @ w0_bf + layer.enc_b[0]
    assert jnp.allclose(enhanced_features[0][0], enc0_ref, atol=2e-3), \
        "encoder mismatch"
    assert enhanced_features[2] is None
    assert enhanced_features[0][1].shape == (H,)   # dim-mismatch fallback ones(H)

    # Also exercise the no-context path.
    enhanced2, imp2 = layer(modality_features, None)
    jax.block_until_ready(imp2)
    assert jnp.allclose(imp2, layer.modality_importance * mask[:, None],
                        atol=1e-6), "no-context importance mismatch"

    print("KERNEL_OK")
</pallas_src>

<mosaic_0001>
module attributes {stable_mosaic.version = 11 : i64} {
  func.func @_encoder_kernel(%arg0: i32, %arg1: i32, %arg2: memref<2x32xf32, #tpu.memory_space<vmem>>, %arg3: memref<1x32x32xbf16, #tpu.memory_space<vmem>>, %arg4: memref<1x1x32xf32, #tpu.memory_space<vmem>>, %arg5: memref<2x32xf32, #tpu.memory_space<vmem>>) attributes {dimension_semantics = [#tpu.dimension_semantics<parallel>, #tpu.dimension_semantics<parallel>], iteration_bounds = array<i64: 1, 1>, scalar_prefetch = 0 : i64, scratch_operands = 0 : i64, tpu.core_type = #tpu.core_type<tc>, window_params = [{transform_indices = @transform_0, window_bounds = array<i64: 2, 32>}, {transform_indices = @transform_1, window_bounds = array<i64: 1, 32, 32>}, {transform_indices = @transform_2, window_bounds = array<i64: 1, 1, 32>}, {transform_indices = @transform_3, window_bounds = array<i64: 2, 32>}]} {
    %c0 = arith.constant 0 : index
    %c0_0 = arith.constant 0 : index
    %0 = vector.load %arg2[%c0, %c0_0] : memref<2x32xf32, #tpu.memory_space<vmem>>, vector<2x32xf32>
    %1 = arith.truncf %0 : vector<2x32xf32> to vector<2x32xbf16>
    %c0_1 = arith.constant 0 : index
    %c0_2 = arith.constant 0 : index
    %c0_3 = arith.constant 0 : index
    %2 = vector.load %arg3[%c0_1, %c0_2, %c0_3] : memref<1x32x32xbf16, #tpu.memory_space<vmem>>, vector<1x32x32xbf16>
    %3 = vector.shape_cast %2 : vector<1x32x32xbf16> to vector<32x32xbf16>
    %cst = arith.constant dense<0.000000e+00> : vector<2x32xf32>
    %4 = tpu.matmul %1, %3, %cst {dimension_numbers = #tpu.dot_dimension_numbers<[1], [0], [0], [1], [0, 0, 1, 1], [], []>} : vector<2x32xbf16>, vector<32x32xbf16>, vector<2x32xf32> -> vector<2x32xf32>
    %c0_4 = arith.constant 0 : index
    %c0_5 = arith.constant 0 : index
    %c0_6 = arith.constant 0 : index
    %5 = vector.load %arg4[%c0_4, %c0_5, %c0_6] : memref<1x1x32xf32, #tpu.memory_space<vmem>>, vector<1x1x32xf32>
    %6 = vector.shape_cast %5 : vector<1x1x32xf32> to vector<1x32xf32>
    %7 = vector.broadcast %6 : vector<1x32xf32> to vector<2x32xf32>
    %8 = arith.addf %4, %7 : vector<2x32xf32>
    %c0_7 = arith.constant 0 : index
    %c0_8 = arith.constant 0 : index
    %9 = vector.load %arg5[%c0_7, %c0_8] : memref<2x32xf32, #tpu.memory_space<vmem>>, vector<2x32xf32>
    tpu.vector_store %arg5[%c0_7, %c0_8], %8 {strides = array<i32>} : memref<2x32xf32, #tpu.memory_space<vmem>>, vector<2x32xf32>,
    return
  }
  func.func @transform_0(%arg0: i32, %arg1: i32) -> (i32, i32) {
    %c0_i32 = arith.constant 0 : i32
    %c0_i32_0 = arith.constant 0 : i32
    return %arg1, %c0_i32 : i32, i32
  }
  func.func @transform_1(%arg0: i32, %arg1: i32) -> (i32, i32, i32) {
    %c0_i32 = arith.constant 0 : i32
    %c0_i32_0 = arith.constant 0 : i32
    %c0_i32_1 = arith.constant 0 : i32
    return %c0_i32, %c0_i32_0, %arg0 : i32, i32, i32
  }
  func.func @transform_2(%arg0: i32, %arg1: i32) -> (i32, i32, i32) {
    %c0_i32 = arith.constant 0 : i32
    %c0_i32_0 = arith.constant 0 : i32
    %c0_i32_1 = arith.constant 0 : i32
    return %c0_i32, %c0_i32_0, %arg0 : i32, i32, i32
  }
  func.func @transform_3(%arg0: i32, %arg1: i32) -> (i32, i32) {
    %c0_i32 = arith.constant 0 : i32
    return %arg1, %arg0 : i32, i32
  }
}

</mosaic_0001>

<llo_original>
// kernel: tpu_custom_call.1
$region0: #{tpu_custom_call.1}
  #allocation0 [shape = 'u32[]', space=smem, size = 0x4, offset = 0x4, fixed_abs, tag = 'smem constant byte address 0x4 - core index']
  #allocation1 [shape = 'u32[72,128]{1,0:T(1,128)}', space=vmem, size = 0x9000, scoped, tag = 'internal scratch']
  %s0 = inlined_call_operand.hbm [shape: f32[2,32], index: 0, kind: input, shape index: {}]
  %s1 = inlined_call_operand.hbm [shape: bf16[4,32,32], index: 1, kind: input, shape index: {}]
  %s2 = inlined_call_operand.hbm [shape: f32[4,1,32], index: 2, kind: input, shape index: {}]
  %s3 = inlined_call_operand.hbm [shape: f32[2,32], index: 3, kind: output, shape index: {}]
  %s4 = sld [smem:[#allocation0]]
  $region34: #{tpu_custom_call.1} parent=0
    _
  %s6 = ssub.s32 1, %s4
  %s7 = scalar_select 0, %s6, %s4
  $region1: #{tpu_custom_call.1} parent=0
    #allocation2 [shape = 'u8[1024]{0}', space=vmem, size = 0x400, scoped, tag = 'input window, operand 0, single buffered']
    #allocation3 [shape = 's32[1]{0}', space=sflag, size = 0x4, scoped, tag = 'scoped memory for tpu_custom_call.1']
    #allocation4 [shape = 's32[1]{0}', space=sflag, size = 0x4, scoped, tag = 'scoped memory for tpu_custom_call.1']
    #allocation5 [shape = 'u8[8192]{0}', space=vmem, size = 0x2000, scoped, tag = 'input window, operand 1, single buffered']
    #allocation6 [shape = 's32[1]{0}', space=sflag, size = 0x4, scoped, tag = 'scoped memory for tpu_custom_call.1']
    #allocation7 [shape = 'u8[512]{0}', space=vmem, size = 0x400, scoped, tag = 'input window, operand 2, single buffered']
    #allocation8 [shape = 'u8[1024]{0}', space=vmem, size = 0x400, scoped, tag = 'output window, operand 0, single buffered']
    %8 = vsyncpa [#allocation3], 0
    %9 = vsyncpa [#allocation6], 0
    %10 = vsyncpa [#allocation4], 0
    // Predicated region
    $region2: #{tpu_custom_call.1} parent=1 // pred_check
      _
    $region3: #{tpu_custom_call.1} parent=1 // pred_check_branch
      %12 = sbr.rel (0) target = $region5
    $region4: #{tpu_custom_call.1} parent=1 // pred_region
      %14 = vsyncadd [#allocation3], 0
      %s16 = sshll.u32 %s0, 4
      %s17 = int_to_ptr.hbm [resolvable:$true] %s16
      %s18 = sshll.u32 [#allocation2], 4
      %s19 = int_to_ptr.vmem [resolvable:$true] %s18
      %21 = dma.hbm_to_vmem [thread:$0]  %s17, 32, %s19, [#allocation3]
    $region5: #{tpu_custom_call.1} parent=1 // pred_fallthru
      _
    // Predicated region
    $region6: #{tpu_custom_call.1} parent=1 // pred_check
      _
    $region7: #{tpu_custom_call.1} parent=1 // pred_check_branch
      %23 = sbr.rel (0) target = $region9
    $region8: #{tpu_custom_call.1} parent=1 // pred_region
      %25 = vsyncadd [#allocation6], 0
      %s26 = sshll.u32 %s1, 4
      %s27 = int_to_ptr.hbm [resolvable:$true] %s26
      %s28 = sshll.u32 [#allocation5], 4
      %s29 = int_to_ptr.vmem [resolvable:$true] %s28
      %34 = dma.hbm_to_vmem [thread:$0]  %s27, 256, %s29, [#allocation6], 64, 64, 4
    $region9: #{tpu_custom_call.1} parent=1 // pred_fallthru
      _
    // Predicated region
    $region10: #{tpu_custom_call.1} parent=1 // pred_check
      _
    $region11: #{tpu_custom_call.1} parent=1 // pred_check_branch
      %36 = sbr.rel (0) target = $region13
    $region12: #{tpu_custom_call.1} parent=1 // pred_region
      %38 = vsyncadd [#allocation6], 0
      %s40 = sshll.u32 %s2, 4
      %s41 = int_to_ptr.hbm [resolvable:$true] %s40
      %s42 = sshll.u32 [#allocation7], 4
      %s43 = int_to_ptr.vmem [resolvable:$true] %s42
      %45 = dma.hbm_to_vmem [thread:$0]  %s41, 16, %s43, [#allocation6]
    $region13: #{tpu_custom_call.1} parent=1 // pred_fallthru
      _
    // Predicated region
    $region14: #{tpu_custom_call.1} parent=1 // pred_check
      _
    $region15: #{tpu_custom_call.1} parent=1 // pred_check_branch
      %47 = sbr.rel (0) target = $region17
    $region16: #{tpu_custom_call.1} parent=1 // pred_region
      %49 = dma.done [#allocation3], 32
    $region17: #{tpu_custom_call.1} parent=1 // pred_fallthru
      _
    // Predicated region
    $region18: #{tpu_custom_call.1} parent=1 // pred_check
      _
    $region19: #{tpu_custom_call.1} parent=1 // pred_check_branch
      %51 = sbr.rel (0) target = $region21
    $region20: #{tpu_custom_call.1} parent=1 // pred_region
      %53 = dma.done [#allocation6], 256
    $region21: #{tpu_custom_call.1} parent=1 // pred_fallthru
      _
    // Predicated region
    $region22: #{tpu_custom_call.1} parent=1 // pred_check
      _
    $region23: #{tpu_custom_call.1} parent=1 // pred_check_branch
      %55 = sbr.rel (0) target = $region25
    $region24: #{tpu_custom_call.1} parent=1 // pred_region
      %57 = dma.done [#allocation6], 16
    $region25: #{tpu_custom_call.1} parent=1 // pred_fallthru
      _
    %v59 = vld [vmem:[#allocation2] sm:$0x3]
    %v60 = vpack.c.bf16 %v59, %v59
    %v61 = vld [vmem:[#allocation5] sm:$0xf]
    %v62 = vld [vmem:[#allocation5 + $0x4] sm:$0xf]
    %v63 = vld [vmem:[#allocation5 + $0x8] sm:$0xf]
    %v64 = vld [vmem:[#allocation5 + $0xc] sm:$0xf]
    %v65 = vld [vmem:[#allocation7] sm:$0x1]
    %v67 = vperm.slane %v65, 0
    %v73 = vunpack.c.l.b16 %v61
    %v74 = vunpack.c.l.b16 %v62
    %v75 = vunpack.c.l.b16 %v63
    %v76 = vunpack.c.l.b16 %v64
    %v77 = vpack.c.b16 %v74, %v73
    %v78 = vpack.c.b16 %v76, %v75
    %vm81 = vcmask 261120
    %v83 = vsel %vm81, %v60, 0
    %85 = vmatpush.bf16.msra.mxu0 0
    %86 = vmatpush.bf16.msra.mxu0 0
    %87 = vmatpush.bf16.msra.mxu0 0
    %88 = vmatpush.bf16.msra.mxu0 0
    %89 = vmatpush.bf16.msra.mxu0 0
    %90 = vmatpush.bf16.msra.mxu0 0
    %91 = vmatpush.bf16.msra.mxu0 %v78
    %92 = vmatpush.bf16.msra.mxu0 %v77
    %93 = vmatmul.bf16.gmra.mxu0 %v83
    %v94 = vpop.f32.mrf.mxu0
    %v95 = vadd.f32 %v67, %v94
    %v96 = vpop.f32.mrf.mxu0
    %97 = vdwg.mxu0
    %vm98 = vcmask 254976
    %99 = vst.msk [vmem:[#allocation8] sm:$0x3] %vm98, %v95
    // Predicated region
    $region26: #{tpu_custom_call.1} parent=1 // pred_check
      _
    $region27: #{tpu_custom_call.1} parent=1 // pred_check_branch
      %101 = sbr.rel (0) target = $region29
    $region28: #{tpu_custom_call.1} parent=1 // pred_region
      %103 = vsyncadd [#allocation4], 0
      %s105 = sshll.u32 [#allocation8], 4
      %s106 = int_to_ptr.vmem [resolvable:$true] %s105
      %s107 = sshll.u32 %s3, 4
      %s108 = int_to_ptr.hbm [resolvable:$true] %s107
      %110 = dma.vmem_to_hbm [thread:$0]  %s106, 32, %s108, [#allocation4]
    $region29: #{tpu_custom_call.1} parent=1 // pred_fallthru
      _
    // Predicated region
    $region30: #{tpu_custom_call.1} parent=1 // pred_check
      _
    $region31: #{tpu_custom_call.1} parent=1 // pred_check_branch
      %112 = sbr.rel (0) target = $region33
    $region32: #{tpu_custom_call.1} parent=1 // pred_region
      %114 = dma.done [#allocation4], 32
    $region33: #{tpu_custom_call.1} parent=1 // pred_fallthru
      _
    %115 = vsyncpa [#allocation3], 1
    %116 = vsyncpa [#allocation6], 1
    %117 = vsyncpa [#allocation4], 1

</llo_original>
